<compile_context>
chip_gen: v7x
topology: tpu7x:2x2x1
jax: 0.10.0
libtpu: 0.0.40
codegen_flags: <defaults>
</compile_context>

<pallas_src>
import numpy as np
import jax
import jax.numpy as jnp
from jax.experimental import pallas as pl
from jax.experimental.pallas import tpu as pltpu


_SMALL_BYTES_THRESHOLD = 512 * 1024   # below this, one VMEM pass beats R DMA descriptors
_TARGET_CHUNK_BYTES = 2 << 20         # ~2 MiB per DMA descriptor when chunking
_MAX_CHUNKS_PER_RANK = 4


def _row_offsets(sizes):
    offs, acc = [], 0
    for s in sizes:
        offs.append(acc)
        acc += s
    return offs, acc


def _build_copy_plan(sizes, row_bytes, target_chunk_bytes):
    """Static list of (rank, src_row, dst_row, n_rows) HBM->HBM sub-copies."""
    offs, _ = _row_offsets(sizes)
    R = len(sizes)
    plan = []
    for r, (sz, off) in enumerate(zip(sizes, offs)):
        if sz == 0:
            continue
        # Split big shards only when a plain one-copy-per-rank plan would
        # leave the DMA queues underfilled (small R).
        n_chunks = 1
        if R <= 4:
            n_chunks = max(1, min(_MAX_CHUNKS_PER_RANK,
                                  -(-(sz * row_bytes) // target_chunk_bytes)))
        base, rem, src = sz // n_chunks, sz % n_chunks, 0
        for c in range(n_chunks):
            rows = base + (1 if c < rem else 0)
            if rows == 0:
                continue
            plan.append((r, src, off + src, rows))
            src += rows
    return plan


def _make_dma_gather_kernel(copy_plan, R):
    """Independent HBM->HBM DMAs at static uneven row offsets."""

    def kernel(*refs):
        shard_refs = refs[:R]
        out_ref = refs[R]
        sems = refs[R + 1]
        copies = []
        # Fire every copy first so they overlap on the DMA engines, then wait.
        for i, (r, src, dst, rows) in enumerate(copy_plan):
            cp = pltpu.make_async_copy(
                shard_refs[r].at[pl.ds(src, rows), :],
                out_ref.at[pl.ds(dst, rows), :],
                sems.at[i],
            )
            cp.start()
            copies.append(cp)
        for cp in copies:
            cp.wait()

    return kernel


def _make_vmem_gather_kernel(sizes):
    """D-tiled VMEM pass: static-offset stores of each shard's rows."""
    R = len(sizes)
    offs, _ = _row_offsets(sizes)

    def kernel(*refs):
        shard_refs = refs[:R]
        out_ref = refs[R]
        for r in range(R):
            out_ref[offs[r]:offs[r] + sizes[r], :] = shard_refs[r][...]

    return kernel


def _pick_tile_d(D):
    if D % 128 != 0:
        return D                      # must take the full (unaligned) extent
    for cand in (1024, 512, 256, 128):
        if D % cand == 0:
            return cand
    return D


def all_gather_into_tensor_uneven(shards, output_split_sizes=None, *,
                                  small_bytes_threshold=_SMALL_BYTES_THRESHOLD,
                                  target_chunk_bytes=_TARGET_CHUNK_BYTES):
    """Pallas equivalent of torch_npu all_gather_into_tensor_uneven.

    shards:             list of (rows_r, D) arrays (one per simulated rank).
    output_split_sizes: per-rank row counts; defaults to each shard's rows.
    Returns the (sum(rows_r), D) gathered tensor.
    """
    if output_split_sizes is None:
        sizes = [int(s.shape[0]) for s in shards]
    else:
        sizes = [int(s) for s in output_split_sizes]

    R = len(shards)
    assert R == len(sizes), "need one split size per rank"
    D = int(shards[0].shape[1])
    dtype = shards[0].dtype
    for r, s in enumerate(shards):
        # Strict contract: rank r contributes exactly sizes[r] rows.
        assert tuple(s.shape) == (sizes[r], D), (r, tuple(s.shape), sizes[r], D)
        assert s.dtype == dtype

    # Drop empty contributions (they carry no bytes and no offset shift).
    keep = [r for r in range(R) if sizes[r] > 0]
    shards = [shards[r] for r in keep]
    sizes = [sizes[r] for r in keep]
    R = len(keep)

    _, total = _row_offsets(sizes)
    if total == 0:
        return jnp.zeros((0, D), dtype)

    itemsize = jnp.dtype(dtype).itemsize
    total_bytes = total * D * itemsize

    def run_vmem_path(vmem_limit_bytes=None):
        tile_d = _pick_tile_d(D)
        cp_kwargs = dict(dimension_semantics=("arbitrary",))
        if vmem_limit_bytes is not None:
            cp_kwargs["vmem_limit_bytes"] = int(vmem_limit_bytes)
        return pl.pallas_call(
            _make_vmem_gather_kernel(sizes),
            out_shape=jax.ShapeDtypeStruct((total, D), dtype),
            grid=(D // tile_d,),
            in_specs=[pl.BlockSpec((sizes[r], tile_d), lambda j: (0, j))
                      for r in range(R)],
            out_specs=pl.BlockSpec((total, tile_d), lambda j: (0, j)),
            compiler_params=pltpu.CompilerParams(**cp_kwargs),
        )(*shards)

    def run_dma_path():
        plan = _build_copy_plan(sizes, D * itemsize, target_chunk_bytes)
        return pl.pallas_call(
            _make_dma_gather_kernel(plan, R),
            out_shape=jax.ShapeDtypeStruct((total, D), dtype),
            in_specs=[pl.BlockSpec(memory_space=pl.ANY)] * R,
            out_specs=pl.BlockSpec(memory_space=pl.ANY),
            scratch_shapes=[pltpu.SemaphoreType.DMA((len(plan),))],
            cost_estimate=pl.CostEstimate(
                flops=0, transcendentals=0,
                bytes_accessed=2 * total_bytes),
        )(*shards)

    # Small gathers are descriptor-overhead bound: one D-tiled VMEM pass wins.
    if total_bytes <= small_bytes_threshold:
        return run_vmem_path()

    try:
        return run_dma_path()
    except pltpu.LoweringException as e:   # loud, narrow fallback
        print("[all_gather_uneven] DMA path failed to lower "
              f"({type(e).__name__}); falling back to D-tiled VMEM path")
        tile_d = _pick_tile_d(D)
        needed = 4 * total * tile_d * itemsize + (4 << 20)   # dbl-buffered tiles + slack
        return run_vmem_path(vmem_limit_bytes=min(needed, 64 << 20))


class AllGatherInTensorUneven:
    """Mirror of the torch module's forward(out_tensor, x, output_split_sizes).

    `x_all_ranks` stands in for what each rank contributes; the returned array
    plays the role of the filled `out_tensor`.
    """

    def forward(self, out_tensor_shape, x_all_ranks, output_split_sizes=None):
        out = all_gather_into_tensor_uneven(x_all_ranks, output_split_sizes)
        assert tuple(out.shape) == tuple(out_tensor_shape)
        return out

    __call__ = forward


if __name__ == "__main__":
    D = 128                      # lane-aligned hidden dim
    mod = AllGatherInTensorUneven()

    # Case 1: small uneven gather (VMEM path), explicit split sizes.
    sizes = [3, 8, 5, 16]
    keys = jax.random.split(jax.random.PRNGKey(0), len(sizes))
    shards = [jax.random.normal(k, (s, D), dtype=jnp.float32)
              for k, s in zip(keys, sizes)]
    out = jax.block_until_ready(mod((sum(sizes), D), shards, sizes))
    ref = jnp.concatenate(shards, axis=0)
    assert out.shape == ref.shape and out.dtype == ref.dtype
    np.testing.assert_array_equal(np.asarray(out), np.asarray(ref))

    # Case 2: output_split_sizes=None path, different uneven split.
    sizes2 = [7, 1, 9, 15]
    keys2 = jax.random.split(jax.random.PRNGKey(1), len(sizes2))
    shards2 = [jax.random.normal(k, (s, D), dtype=jnp.float32)
               for k, s in zip(keys2, sizes2)]
    out2 = jax.block_until_ready(mod((sum(sizes2), D), shards2))
    np.testing.assert_array_equal(
        np.asarray(out2), np.asarray(jnp.concatenate(shards2, axis=0)))

    # Case 3: medium gather above the small-size threshold -> pure-DMA path.
    sizes3 = [700, 300, 200, 100]
    keys3 = jax.random.split(jax.random.PRNGKey(2), len(sizes3))
    shards3 = [jax.random.normal(k, (s, D), dtype=jnp.float32)
               for k, s in zip(keys3, sizes3)]
    ref3 = jnp.concatenate(shards3, axis=0)
    out3 = jax.block_until_ready(all_gather_into_tensor_uneven(shards3, sizes3))
    np.testing.assert_array_equal(np.asarray(out3), np.asarray(ref3))

    # Case 4: same data with a tiny chunk target to exercise the chunked-DMA plan.
    out4 = jax.block_until_ready(
        all_gather_into_tensor_uneven(shards3, sizes3,
                                      target_chunk_bytes=128 * 1024))
    np.testing.assert_array_equal(np.asarray(out4), np.asarray(ref3))

    print("KERNEL_OK")
</pallas_src>

<mosaic_0001>
module attributes {stable_mosaic.version = 11 : i64} {
  func.func @kernel(%arg0: i32, %arg1: memref<3x128xf32, #tpu.memory_space<vmem>>, %arg2: memref<8x128xf32, #tpu.memory_space<vmem>>, %arg3: memref<5x128xf32, #tpu.memory_space<vmem>>, %arg4: memref<16x128xf32, #tpu.memory_space<vmem>>, %arg5: memref<32x128xf32, #tpu.memory_space<vmem>>) attributes {dimension_semantics = [#tpu.dimension_semantics<arbitrary>], iteration_bounds = array<i64: 1>, scalar_prefetch = 0 : i64, scratch_operands = 0 : i64, tpu.core_type = #tpu.core_type<tc>, window_params = [{transform_indices = @transform_0, window_bounds = array<i64: 3, 128>}, {transform_indices = @transform_1, window_bounds = array<i64: 8, 128>}, {transform_indices = @transform_2, window_bounds = array<i64: 5, 128>}, {transform_indices = @transform_3, window_bounds = array<i64: 16, 128>}, {transform_indices = @transform_4, window_bounds = array<i64: 32, 128>}]} {
    %c0 = arith.constant 0 : index
    %c0_0 = arith.constant 0 : index
    %0 = vector.load %arg1[%c0, %c0_0] : memref<3x128xf32, #tpu.memory_space<vmem>>, vector<3x128xf32>
    %c0_1 = arith.constant 0 : index
    %c0_2 = arith.constant 0 : index
    %1 = vector.load %arg5[%c0_1, %c0_2] : memref<32x128xf32, #tpu.memory_space<vmem>>, vector<3x128xf32>
    tpu.vector_store %arg5[%c0_1, %c0_2], %0 {strides = array<i32>} : memref<32x128xf32, #tpu.memory_space<vmem>>, vector<3x128xf32>,
    %c0_3 = arith.constant 0 : index
    %c0_4 = arith.constant 0 : index
    %2 = vector.load %arg2[%c0_3, %c0_4] : memref<8x128xf32, #tpu.memory_space<vmem>>, vector<8x128xf32>
    %c3 = arith.constant 3 : index
    %c0_5 = arith.constant 0 : index
    %3 = vector.load %arg5[%c3, %c0_5] : memref<32x128xf32, #tpu.memory_space<vmem>>, vector<8x128xf32>
    tpu.vector_store %arg5[%c3, %c0_5], %2 {strides = array<i32>} : memref<32x128xf32, #tpu.memory_space<vmem>>, vector<8x128xf32>,
    %c0_6 = arith.constant 0 : index
    %c0_7 = arith.constant 0 : index
    %4 = vector.load %arg3[%c0_6, %c0_7] : memref<5x128xf32, #tpu.memory_space<vmem>>, vector<5x128xf32>
    %c11 = arith.constant 11 : index
    %c0_8 = arith.constant 0 : index
    %5 = vector.load %arg5[%c11, %c0_8] : memref<32x128xf32, #tpu.memory_space<vmem>>, vector<5x128xf32>
    tpu.vector_store %arg5[%c11, %c0_8], %4 {strides = array<i32>} : memref<32x128xf32, #tpu.memory_space<vmem>>, vector<5x128xf32>,
    %c0_9 = arith.constant 0 : index
    %c0_10 = arith.constant 0 : index
    %6 = vector.load %arg4[%c0_9, %c0_10] : memref<16x128xf32, #tpu.memory_space<vmem>>, vector<16x128xf32>
    %c16 = arith.constant 16 : index
    %c0_11 = arith.constant 0 : index
    %7 = vector.load %arg5[%c16, %c0_11] : memref<32x128xf32, #tpu.memory_space<vmem>>, vector<16x128xf32>
    tpu.vector_store %arg5[%c16, %c0_11], %6 {strides = array<i32>} : memref<32x128xf32, #tpu.memory_space<vmem>>, vector<16x128xf32>,
    return
  }
  func.func @transform_0(%arg0: i32) -> (i32, i32) {
    %c0_i32 = arith.constant 0 : i32
    %c0_i32_0 = arith.constant 0 : i32
    return %c0_i32, %arg0 : i32, i32
  }
  func.func @transform_1(%arg0: i32) -> (i32, i32) {
    %c0_i32 = arith.constant 0 : i32
    %c0_i32_0 = arith.constant 0 : i32
    return %c0_i32, %arg0 : i32, i32
  }
  func.func @transform_2(%arg0: i32) -> (i32, i32) {
    %c0_i32 = arith.constant 0 : i32
    %c0_i32_0 = arith.constant 0 : i32
    return %c0_i32, %arg0 : i32, i32
  }
  func.func @transform_3(%arg0: i32) -> (i32, i32) {
    %c0_i32 = arith.constant 0 : i32
    %c0_i32_0 = arith.constant 0 : i32
    return %c0_i32, %arg0 : i32, i32
  }
  func.func @transform_4(%arg0: i32) -> (i32, i32) {
    %c0_i32 = arith.constant 0 : i32
    %c0_i32_0 = arith.constant 0 : i32
    return %c0_i32, %arg0 : i32, i32
  }
}

</mosaic_0001>

<llo_original>
// kernel: tpu_custom_call.1
$region0: #{tpu_custom_call.1}
  #allocation0 [shape = 'u32[]', space=smem, size = 0x4, offset = 0x4, fixed_abs, tag = 'smem constant byte address 0x4 - core index']
  #allocation1 [shape = 'u32[144,128]{1,0:T(1,128)}', space=vmem, size = 0x12000, scoped, tag = 'internal scratch']
  %s0 = inlined_call_operand.hbm [shape: f32[3,128], index: 0, kind: input, shape index: {}]
  %s1 = inlined_call_operand.hbm [shape: f32[8,128], index: 1, kind: input, shape index: {}]
  %s2 = inlined_call_operand.hbm [shape: f32[5,128], index: 2, kind: input, shape index: {}]
  %s3 = inlined_call_operand.hbm [shape: f32[16,128], index: 3, kind: input, shape index: {}]
  %s4 = inlined_call_operand.hbm [shape: f32[32,128], index: 4, kind: output, shape index: {}]
  %s5 = sld [smem:[#allocation0]]
  $region42: #{tpu_custom_call.1} parent=0
    _
  %s7 = ssub.s32 1, %s5
  %s8 = scalar_select 0, %s7, %s5
  $region1: #{tpu_custom_call.1} parent=0
    #allocation2 [shape = 'u8[2048]{0}', space=vmem, size = 0x800, scoped, tag = 'input window, operand 0, single buffered']
    #allocation3 [shape = 's32[1]{0}', space=sflag, size = 0x4, scoped, tag = 'scoped memory for tpu_custom_call.1']
    #allocation4 [shape = 's32[1]{0}', space=sflag, size = 0x4, scoped, tag = 'scoped memory for tpu_custom_call.1']
    #allocation5 [shape = 'u8[4096]{0}', space=vmem, size = 0x1000, scoped, tag = 'input window, operand 1, single buffered']
    #allocation6 [shape = 's32[1]{0}', space=sflag, size = 0x4, scoped, tag = 'scoped memory for tpu_custom_call.1']
    #allocation7 [shape = 'u8[4096]{0}', space=vmem, size = 0x1000, scoped, tag = 'input window, operand 2, single buffered']
    #allocation8 [shape = 'u8[8192]{0}', space=vmem, size = 0x2000, scoped, tag = 'input window, operand 3, single buffered']
    #allocation9 [shape = 's32[1]{0}', space=sflag, size = 0x4, scoped, tag = 'scoped memory for tpu_custom_call.1']
    #allocation10 [shape = 'u8[16384]{0}', space=vmem, size = 0x4000, scoped, tag = 'output window, operand 0, single buffered']
    %9 = vsyncpa [#allocation3], 0
    %10 = vsyncpa [#allocation6], 0
    %11 = vsyncpa [#allocation9], 0
    %12 = vsyncpa [#allocation4], 0
    // Predicated region
    $region2: #{tpu_custom_call.1} parent=1 // pred_check
      _
    $region3: #{tpu_custom_call.1} parent=1 // pred_check_branch
      %14 = sbr.rel (0) target = $region5
    $region4: #{tpu_custom_call.1} parent=1 // pred_region
      %s16 = ssub.s32 64, 64
      %17 = vsyncadd [#allocation3], %s16
      %s19 = sshll.u32 [#allocation2], 4
      %s20 = int_to_ptr.vmem [resolvable:$true] %s19
      %22 = dma.hbm_to_vmem [thread:$0]  %s0, 64, %s20, [#allocation3]
    $region5: #{tpu_custom_call.1} parent=1 // pred_fallthru
      _
    // Predicated region
    $region6: #{tpu_custom_call.1} parent=1 // pred_check
      _
    $region7: #{tpu_custom_call.1} parent=1 // pred_check_branch
      %24 = sbr.rel (0) target = $region9
    $region8: #{tpu_custom_call.1} parent=1 // pred_region
      %s26 = ssub.s32 128, 128
      %27 = vsyncadd [#allocation6], %s26
      %s29 = sshll.u32 [#allocation5], 4
      %s30 = int_to_ptr.vmem [resolvable:$true] %s29
      %32 = dma.hbm_to_vmem [thread:$0]  %s1, 128, %s30, [#allocation6]
    $region9: #{tpu_custom_call.1} parent=1 // pred_fallthru
      _
    // Predicated region
    $region10: #{tpu_custom_call.1} parent=1 // pred_check
      _
    $region11: #{tpu_custom_call.1} parent=1 // pred_check_branch
      %34 = sbr.rel (0) target = $region13
    $region12: #{tpu_custom_call.1} parent=1 // pred_region
      %s36 = ssub.s32 128, 128
      %37 = vsyncadd [#allocation6], %s36
      %s39 = sshll.u32 [#allocation7], 4
      %s40 = int_to_ptr.vmem [resolvable:$true] %s39
      %42 = dma.hbm_to_vmem [thread:$0]  %s2, 128, %s40, [#allocation6]
    $region13: #{tpu_custom_call.1} parent=1 // pred_fallthru
      _
    // Predicated region
    $region14: #{tpu_custom_call.1} parent=1 // pred_check
      _
    $region15: #{tpu_custom_call.1} parent=1 // pred_check_branch
      %44 = sbr.rel (0) target = $region17
    $region16: #{tpu_custom_call.1} parent=1 // pred_region
      %s46 = ssub.s32 256, 256
      %47 = vsyncadd [#allocation9], %s46
      %s48 = sshll.u32 [#allocation8], 4
      %s49 = int_to_ptr.vmem [resolvable:$true] %s48
      %54 = dma.hbm_to_vmem [thread:$0]  %s3, 256, %s49, [#allocation9], 128, 128, 8
    $region17: #{tpu_custom_call.1} parent=1 // pred_fallthru
      _
    // Predicated region
    $region18: #{tpu_custom_call.1} parent=1 // pred_check
      _
    $region19: #{tpu_custom_call.1} parent=1 // pred_check_branch
      %56 = sbr.rel (0) target = $region21
    $region20: #{tpu_custom_call.1} parent=1 // pred_region
      %57 = dma.done [#allocation3], 64
    $region21: #{tpu_custom_call.1} parent=1 // pred_fallthru
      _
    // Predicated region
    $region22: #{tpu_custom_call.1} parent=1 // pred_check
      _
    $region23: #{tpu_custom_call.1} parent=1 // pred_check_branch
      %59 = sbr.rel (0) target = $region25
    $region24: #{tpu_custom_call.1} parent=1 // pred_region
      %60 = dma.done [#allocation6], 128
    $region25: #{tpu_custom_call.1} parent=1 // pred_fallthru
      _
    // Predicated region
    $region26: #{tpu_custom_call.1} parent=1 // pred_check
      _
    $region27: #{tpu_custom_call.1} parent=1 // pred_check_branch
      %62 = sbr.rel (0) target = $region29
    $region28: #{tpu_custom_call.1} parent=1 // pred_region
      %63 = dma.done [#allocation6], 128
    $region29: #{tpu_custom_call.1} parent=1 // pred_fallthru
      _
    // Predicated region
    $region30: #{tpu_custom_call.1} parent=1 // pred_check
      _
    $region31: #{tpu_custom_call.1} parent=1 // pred_check_branch
      %65 = sbr.rel (0) target = $region33
    $region32: #{tpu_custom_call.1} parent=1 // pred_region
      %66 = dma.done [#allocation9], 256
    $region33: #{tpu_custom_call.1} parent=1 // pred_fallthru
      _
    %v67 = vld [vmem:[#allocation2] sm:$0x7]
    %68 = vst [vmem:[#allocation10] sm:$0x7] %v67
    %v69 = vld [vmem:[#allocation5] sm:$0xff]
    %70 = vst [vmem:[#allocation10 + $0x3] sm:$0xff] %v69
    %v71 = vld [vmem:[#allocation7] sm:$0x1f]
    %72 = vst [vmem:[#allocation10 + $0xb] sm:$0x1f] %v71
    %v73 = vld [vmem:[#allocation8] sm:$0xff]
    %v74 = vld [vmem:[#allocation8 + $0x8] sm:$0xff]
    %75 = vst [vmem:[#allocation10 + $0x10] sm:$0xff] %v73
    %76 = vst [vmem:[#allocation10 + $0x18] sm:$0xff] %v74
    // Predicated region
    $region34: #{tpu_custom_call.1} parent=1 // pred_check
      _
    $region35: #{tpu_custom_call.1} parent=1 // pred_check_branch
      %78 = sbr.rel (0) target = $region37
    $region36: #{tpu_custom_call.1} parent=1 // pred_region
      %s80 = ssub.s32 512, 512
      %81 = vsyncadd [#allocation4], %s80
      %s82 = sshll.u32 [#allocation10], 4
      %s83 = int_to_ptr.vmem [resolvable:$true] %s82
      %88 = dma.vmem_to_hbm [thread:$0]  %s83, 512, %s4, [#allocation4], 128, 128, 8
    $region37: #{tpu_custom_call.1} parent=1 // pred_fallthru
      _
    // Predicated region
    $region38: #{tpu_custom_call.1} parent=1 // pred_check
      _
    $region39: #{tpu_custom_call.1} parent=1 // pred_check_branch
      %90 = sbr.rel (0) target = $region41
    $region40: #{tpu_custom_call.1} parent=1 // pred_region
      %91 = dma.done [#allocation4], 512
    $region41: #{tpu_custom_call.1} parent=1 // pred_fallthru
      _
    %92 = vsyncpa [#allocation3], 1
    %93 = vsyncpa [#allocation6], 1
    %94 = vsyncpa [#allocation9], 1
    %95 = vsyncpa [#allocation4], 1

</llo_original>
